<compile_context>
chip_gen: v6e
topology: v6e:2x2x1
jax: 0.10.0
libtpu: 0.0.40
codegen_flags: <defaults>
</compile_context>

<pallas_src>
import functools

import jax
import jax.numpy as jnp
from jax.experimental import pallas as pl
from jax.experimental.pallas import tpu as pltpu


_VMEM_BUDGET = 40 * 1024 * 1024   # target working set (double-buffered blocks)
_VMEM_LIMIT = 48 * 1024 * 1024    # scoped-VMEM limit handed to Mosaic (v7x-safe)


def _round_up(n: int, m: int) -> int:
    return ((n + m - 1) // m) * m


def _pick_tile(total: int, cap: int) -> int:
    """Largest multiple of 128 that divides `total` (a multiple of 128), <= cap."""
    t = max(128, min(total, (cap // 128) * 128))
    while total % t != 0:
        t -= 128
    return t


# ----------------------------- kernels ------------------------------------- #

def _head_kernel(x_ref, w_ref, b_ref, inv_t_ref, o_ref):
    """Single MXU pass over the full (padded) hidden dim; bias add and
    temperature scale fused into the tile store."""
    o_ref[...] = (
        jnp.dot(x_ref[...], w_ref[...], preferred_element_type=jnp.float32)
        + b_ref[...]
    ) * inv_t_ref[0]


def _head_kernel_ksplit(x_ref, w_ref, b_ref, inv_t_ref, o_ref):
    """Hidden dim split over the innermost ('arbitrary') grid axis.  The f32
    output block index is constant across k, so accumulate straight into o_ref
    (no VMEM scratch)."""
    k = pl.program_id(2)

    @pl.when(k == 0)
    def _():
        o_ref[...] = jnp.zeros_like(o_ref)

    o_ref[...] += jnp.dot(x_ref[...], w_ref[...],
                          preferred_element_type=jnp.float32)

    @pl.when(k == pl.num_programs(2) - 1)
    def _():
        o_ref[...] = (o_ref[...] + b_ref[...]) * inv_t_ref[0]


# --------------------------- jitted forward -------------------------------- #

@functools.partial(jax.jit, static_argnames=("num_classes",))
def _forward_impl(x, w_padded, b_padded, inv_t, *, num_classes):
    B, H = x.shape
    Hp, Cp = w_padded.shape

    # ---- batch tiling (bf16 packs 16 sublanes per vreg) ----
    if B <= 512:
        Bp = _round_up(B, 16)
        tm = Bp                       # single batch tile; no 129 -> 256 blow-up
    else:
        tm = 256                      # fill the 256x256 MXU on v6e/v7x
        Bp = _round_up(B, tm)

    # ---- class tiling ----
    tn = _pick_tile(Cp, 512)
    # v7x megacore: keep >= 2 blocks along the parallel grid when possible.
    if Bp // tm == 1 and Cp // tn < 2 and Cp >= 256:
        tn = _pick_tile(Cp, Cp // 2)

    # ---- single-shot (hidden resident) vs k-split path ----
    def _single_bytes(tn_):
        # double-buffered x, W and output blocks (bias negligible)
        return 2 * (tm * Hp * 2 + Hp * tn_ * 2 + tm * tn_ * 4)

    tn_single = tn
    while _single_bytes(tn_single) > _VMEM_BUDGET and tn_single > 128:
        tn_single = _pick_tile(Cp, tn_single - 128)
    use_single = _single_bytes(tn_single) <= _VMEM_BUDGET

    # Zero-pad activations; padded hidden cols meet zero rows in W_padded.
    x_pad = jnp.pad(x.astype(jnp.bfloat16), ((0, Bp - B), (0, Hp - H)))

    smem_spec = pl.BlockSpec(memory_space=pltpu.MemorySpace.SMEM)  # 1/T scalar

    if use_single:
        tn = tn_single
        # Class tiles on the OUTER axis, batch tiles INNER: the W block index
        # is invariant over the inner axis, so each W column-block is DMA'd
        # once total; only the (small) activation tile is re-streamed.
        grid = (Cp // tn, Bp // tm)
        in_specs = [
            pl.BlockSpec((tm, Hp), lambda j, i: (i, 0)),   # x
            pl.BlockSpec((Hp, tn), lambda j, i: (0, j)),   # W
            pl.BlockSpec((1, tn), lambda j, i: (0, j)),    # bias
            smem_spec,                                      # 1/T
        ]
        out_spec = pl.BlockSpec((tm, tn), lambda j, i: (i, j))
        kernel = _head_kernel
        semantics = ("parallel", "parallel")
        bytes_accessed = ((Cp // tn) * Bp * Hp * 2 + Hp * Cp * 2
                          + Cp * 4 + Bp * Cp * 4)
    else:
        tk = _pick_tile(Hp, 2048)
        while (2 * (tm * tk * 2 + tk * tn * 2 + tm * tn * 4) > _VMEM_BUDGET
               and tk > 128):
            tk = _pick_tile(Hp, tk - 128)
        grid = (Cp // tn, Bp // tm, Hp // tk)
        in_specs = [
            pl.BlockSpec((tm, tk), lambda j, i, k: (i, k)),   # x
            pl.BlockSpec((tk, tn), lambda j, i, k: (k, j)),   # W
            pl.BlockSpec((1, tn), lambda j, i, k: (0, j)),    # bias
            smem_spec,                                         # 1/T
        ]
        out_spec = pl.BlockSpec((tm, tn), lambda j, i, k: (i, j))
        kernel = _head_kernel_ksplit
        semantics = ("parallel", "parallel", "arbitrary")
        bytes_accessed = ((Cp // tn) * Bp * Hp * 2
                          + (Bp // tm) * Hp * Cp * 2
                          + Cp * 4 + Bp * Cp * 4)

    cost = pl.CostEstimate(
        flops=2 * Bp * Hp * Cp,
        transcendentals=0,
        bytes_accessed=int(bytes_accessed),
    )

    out_padded = pl.pallas_call(
        kernel,
        out_shape=jax.ShapeDtypeStruct((Bp, Cp), jnp.float32),
        grid_spec=pltpu.PrefetchScalarGridSpec(
            num_scalar_prefetch=0,
            grid=grid,
            in_specs=in_specs,
            out_specs=out_spec,
        ),
        compiler_params=pltpu.CompilerParams(
            dimension_semantics=semantics,
            vmem_limit_bytes=_VMEM_LIMIT,
        ),
        cost_estimate=cost,
    )(x_pad, w_padded, b_padded, inv_t)

    # Strip batch / class padding (fused into the same jitted program).
    return out_padded[:B, :num_classes]


# ------------------------------ module ------------------------------------- #

class ModelWithTemperature:
    """JAX/Pallas port of calibrate.engine.temperature_scaling.ModelWithTemperature.

    Wraps a linear classifier (deterministic synthetic weights) and applies
    temperature scaling to its output logits inside a single fused, tiled
    Pallas kernel.  Temperature is passed to the kernel as data (SMEM scalar),
    so mutating it (e.g. after calibration) is reflected without retracing.
    """

    def __init__(self, hidden: int, num_classes: int, temperature: float = 1.0):
        self.hidden = hidden
        self.num_classes = num_classes
        self.temperature = float(temperature)   # nn.Module default is 1.0

        # Deterministic parameter init for the wrapped model (synthetic).
        kw, kb = jax.random.split(jax.random.PRNGKey(42))
        self.w = (
            jax.random.normal(kw, (hidden, num_classes), jnp.float32)
            / jnp.sqrt(jnp.float32(hidden))
        )
        self.b = jax.random.normal(kb, (1, num_classes), jnp.float32) * 0.01

        # Lane-dense padded parameters: hidden / num_classes padded to multiples
        # of 128 (zero rows/cols don't change the matmul).  Weights in bf16 for
        # the MXU; bias stays f32 (added to the f32 accumulator).
        hp = _round_up(hidden, 128)
        cp = _round_up(num_classes, 128)
        self.w_padded = jnp.pad(
            self.w.astype(jnp.bfloat16),
            ((0, hp - hidden), (0, cp - num_classes)),
        )
        self.b_padded = jnp.pad(self.b, ((0, 0), (0, cp - num_classes)))

    def get_temperature(self):
        return self.temperature

    def temperature_scale(self, logits):
        return logits / self.temperature

    def __call__(self, x):
        return self.forward(x)

    def forward(self, x):
        B, H = x.shape
        assert H == self.hidden, f"expected hidden={self.hidden}, got {H}"
        inv_t = jnp.asarray([1.0 / self.temperature], dtype=jnp.float32)
        return _forward_impl(x, self.w_padded, self.b_padded, inv_t,
                             num_classes=self.num_classes)

    # TODO(synk): set_temperature / set_temperature_ng are host-side calibration
    # loops (LBFGS / grid search over NLL & ECE on a validation set, ECELoss);
    # they are not part of the forward hot path and are left unimplemented.


if __name__ == "__main__":
    B, H, C = 8, 32, 16  # small shapes: batch=8, hidden=32, num_classes=16

    key = jax.random.PRNGKey(0)
    x = jax.random.normal(key, (B, H), jnp.float32)

    model = ModelWithTemperature(hidden=H, num_classes=C, temperature=1.5)
    out = jax.block_until_ready(model(x))

    # Pure-JAX reference with the same bf16 input/weight cast + f32 accumulate.
    xb = x.astype(jnp.bfloat16).astype(jnp.float32)
    wb = model.w.astype(jnp.bfloat16).astype(jnp.float32)
    ref = (xb @ wb + model.b) / model.temperature

    assert out.shape == (B, C)
    assert out.dtype == jnp.float32
    assert jnp.allclose(out, ref, atol=1e-3, rtol=1e-3)

    # Temperature is data, not a baked constant: mutate and re-run (no retrace).
    model.temperature = 3.0
    out2 = jax.block_until_ready(model(x))
    ref2 = (xb @ wb + model.b) / model.temperature
    assert jnp.allclose(out2, ref2, atol=1e-3, rtol=1e-3)

    print("KERNEL_OK")
</pallas_src>

<mosaic_0001>
module attributes {stable_mosaic.version = 11 : i64} {
  func.func @_head_kernel(%arg0: i32, %arg1: i32, %arg2: memref<16x128xbf16, #tpu.memory_space<vmem>>, %arg3: memref<128x128xbf16, #tpu.memory_space<vmem>>, %arg4: memref<1x128xf32, #tpu.memory_space<vmem>>, %arg5: memref<1xf32, #tpu.memory_space<smem>>, %arg6: memref<16x128xf32, #tpu.memory_space<vmem>>) attributes {dimension_semantics = [#tpu.dimension_semantics<parallel>, #tpu.dimension_semantics<parallel>], iteration_bounds = array<i64: 1, 1>, scalar_prefetch = 0 : i64, scratch_operands = 0 : i64, tpu.core_type = #tpu.core_type<tc>, window_params = [{transform_indices = @transform_0, window_bounds = array<i64: 16, 128>}, {transform_indices = @transform_1, window_bounds = array<i64: 128, 128>}, {transform_indices = @transform_2, window_bounds = array<i64: 1, 128>}, {transform_indices = @transform_3, window_bounds = array<i64: 1>}, {transform_indices = @transform_4, window_bounds = array<i64: 16, 128>}]} {
    %c0 = arith.constant 0 : index
    %c0_0 = arith.constant 0 : index
    %0 = vector.load %arg2[%c0, %c0_0] : memref<16x128xbf16, #tpu.memory_space<vmem>>, vector<16x128xbf16>
    %c0_1 = arith.constant 0 : index
    %c0_2 = arith.constant 0 : index
    %1 = vector.load %arg3[%c0_1, %c0_2] : memref<128x128xbf16, #tpu.memory_space<vmem>>, vector<128x128xbf16>
    %cst = arith.constant dense<0.000000e+00> : vector<16x128xf32>
    %2 = tpu.matmul %0, %1, %cst {dimension_numbers = #tpu.dot_dimension_numbers<[1], [0], [0], [1], [0, 0, 1, 1], [], []>} : vector<16x128xbf16>, vector<128x128xbf16>, vector<16x128xf32> -> vector<16x128xf32>
    %c0_3 = arith.constant 0 : index
    %c0_4 = arith.constant 0 : index
    %3 = vector.load %arg4[%c0_3, %c0_4] : memref<1x128xf32, #tpu.memory_space<vmem>>, vector<1x128xf32>
    %4 = vector.broadcast %3 : vector<1x128xf32> to vector<16x128xf32>
    %5 = arith.addf %2, %4 : vector<16x128xf32>
    %c0_5 = arith.constant 0 : index
    %6 = memref.load %arg5[%c0_5] : memref<1xf32, #tpu.memory_space<smem>>
    %7 = vector.broadcast %6 : f32 to vector<16x128xf32>
    %8 = arith.mulf %5, %7 : vector<16x128xf32>
    %c0_6 = arith.constant 0 : index
    %c0_7 = arith.constant 0 : index
    %9 = vector.load %arg6[%c0_6, %c0_7] : memref<16x128xf32, #tpu.memory_space<vmem>>, vector<16x128xf32>
    tpu.vector_store %arg6[%c0_6, %c0_7], %8 {strides = array<i32>} : memref<16x128xf32, #tpu.memory_space<vmem>>, vector<16x128xf32>,
    return
  }
  func.func @transform_0(%arg0: i32, %arg1: i32) -> (i32, i32) {
    %c0_i32 = arith.constant 0 : i32
    %c0_i32_0 = arith.constant 0 : i32
    return %arg1, %c0_i32 : i32, i32
  }
  func.func @transform_1(%arg0: i32, %arg1: i32) -> (i32, i32) {
    %c0_i32 = arith.constant 0 : i32
    %c0_i32_0 = arith.constant 0 : i32
    return %c0_i32, %arg0 : i32, i32
  }
  func.func @transform_2(%arg0: i32, %arg1: i32) -> (i32, i32) {
    %c0_i32 = arith.constant 0 : i32
    %c0_i32_0 = arith.constant 0 : i32
    return %c0_i32, %arg0 : i32, i32
  }
  func.func @transform_3(%arg0: i32, %arg1: i32) -> i32 {
    %c0_i32 = arith.constant 0 : i32
    %c0_i32_0 = arith.constant 0 : i32
    return %c0_i32 : i32
  }
  func.func @transform_4(%arg0: i32, %arg1: i32) -> (i32, i32) {
    %c0_i32 = arith.constant 0 : i32
    return %arg1, %arg0 : i32, i32
  }
}

</mosaic_0001>

<llo_original>
// kernel: _forward_impl.1
$region0: #{_forward_impl.1}
  #allocation0 [shape = 'u32[]', space=smem, size = 0x4, offset = 0x4, fixed_abs, tag = 'smem constant byte address 0x4 - core index']
  #allocation1 [shape = 'u32[144,128]{1,0:T(1,128)}', space=vmem, size = 0x12000, scoped, tag = 'internal scratch']
  #allocation2 [shape = 'f32[1]{0:T(128)S(6)}', space=smem, size = 0x200, scoped, tag = 'scoped memory for _forward_impl.1']
  %s0 = inlined_call_operand.vmem [shape: bf16[16,128], index: 0, kind: input, shape index: {}]
  %s1 = inlined_call_operand.hbm [shape: bf16[128,128], index: 1, kind: input, shape index: {}]
  %s2 = inlined_call_operand.vmem [shape: f32[1,128], index: 2, kind: input, shape index: {}]
  %s3 = inlined_call_operand.<no memory space> [shape: f32[1], index: 3, kind: input, shape index: {}]
  %s4 = inlined_call_operand.vmem [shape: f32[16,128], index: 4, kind: output, shape index: {}]
  %s5 = sld [smem:[#allocation0]]
  $region30: #{_forward_impl.1} parent=0
    _
  %s7 = ssub.s32 1, %s5
  %s8 = scalar_select 0, %s7, %s5
  %9 = sst [smem:[#allocation2]] %s3
  $region1: #{_forward_impl.1} parent=0
    #allocation3 [shape = 'u8[32768]{0}', space=vmem, size = 0x8000, scoped, tag = 'input window, operand 1, single buffered']
    #allocation4 [shape = 's32[1]{0}', space=sflag, size = 0x4, scoped, tag = 'scoped memory for _forward_impl.1']
    %10 = vsyncpa [#allocation4], 0
    // Predicated region
    $region2: #{_forward_impl.1} parent=1 // pred_check
      _
    $region3: #{_forward_impl.1} parent=1 // pred_check_branch
      %12 = sbr.rel (0) target = $region5
    $region4: #{_forward_impl.1} parent=1 // pred_region
      _
    $region5: #{_forward_impl.1} parent=1 // pred_fallthru
      _
    // Predicated region
    $region6: #{_forward_impl.1} parent=1 // pred_check
      _
    $region7: #{_forward_impl.1} parent=1 // pred_check_branch
      %14 = sbr.rel (0) target = $region9
    $region8: #{_forward_impl.1} parent=1 // pred_region
      %s16 = ssub.s32 1024, 1024
      %17 = vsyncadd [#allocation4], %s16
      %s18 = sshll.u32 [#allocation3], 4
      %s19 = int_to_ptr.vmem [resolvable:$true] %s18
      %24 = dma.hbm_to_vmem [thread:$0]  %s1, 1024, %s19, [#allocation4], 64, 64, 4
    $region9: #{_forward_impl.1} parent=1 // pred_fallthru
      _
    // Predicated region
    $region10: #{_forward_impl.1} parent=1 // pred_check
      _
    $region11: #{_forward_impl.1} parent=1 // pred_check_branch
      %26 = sbr.rel (0) target = $region13
    $region12: #{_forward_impl.1} parent=1 // pred_region
      _
    $region13: #{_forward_impl.1} parent=1 // pred_fallthru
      _
    // Predicated region
    $region14: #{_forward_impl.1} parent=1 // pred_check
      _
    $region15: #{_forward_impl.1} parent=1 // pred_check_branch
      %28 = sbr.rel (0) target = $region17
    $region16: #{_forward_impl.1} parent=1 // pred_region
      _
    $region17: #{_forward_impl.1} parent=1 // pred_fallthru
      _
    // Predicated region
    $region18: #{_forward_impl.1} parent=1 // pred_check
      _
    $region19: #{_forward_impl.1} parent=1 // pred_check_branch
      %30 = sbr.rel (0) target = $region21
    $region20: #{_forward_impl.1} parent=1 // pred_region
      %31 = dma.done [#allocation4], 1024
    $region21: #{_forward_impl.1} parent=1 // pred_fallthru
      _
    %v33 = vld [vmem:[%s0] sm:$0xf]
    %v34 = vld [vmem:[%s0 + $0x4] sm:$0xf]
    %v35 = vld [vmem:[#allocation3] sm:$0xf]
    %v36 = vld [vmem:[#allocation3 + $0x4] sm:$0xf]
    %v37 = vld [vmem:[#allocation3 + $0x8] sm:$0xf]
    %v38 = vld [vmem:[#allocation3 + $0xc] sm:$0xf]
    %v39 = vld [vmem:[#allocation3 + $0x10] sm:$0xf]
    %v40 = vld [vmem:[#allocation3 + $0x14] sm:$0xf]
    %v41 = vld [vmem:[#allocation3 + $0x18] sm:$0xf]
    %v42 = vld [vmem:[#allocation3 + $0x1c] sm:$0xf]
    %v43 = vld [vmem:[#allocation3 + $0x20] sm:$0xf]
    %v44 = vld [vmem:[#allocation3 + $0x24] sm:$0xf]
    %v45 = vld [vmem:[#allocation3 + $0x28] sm:$0xf]
    %v46 = vld [vmem:[#allocation3 + $0x2c] sm:$0xf]
    %v47 = vld [vmem:[#allocation3 + $0x30] sm:$0xf]
    %v48 = vld [vmem:[#allocation3 + $0x34] sm:$0xf]
    %v49 = vld [vmem:[#allocation3 + $0x38] sm:$0xf]
    %v50 = vld [vmem:[#allocation3 + $0x3c] sm:$0xf]
    %v51 = vld [vmem:[%s2] sm:$0x1]
    %v53 = vlaneseq
    %v54 = vshrl.u32 %v53, 7
    %v55 = vsub.s32 0, %v54
    %v56 = vrot.slane %v51, %v55
    %v60 = vunpack.c.l.b16 %v33
    %v61 = vunpack.c.l.b16 %v34
    %v62 = vpack.c.b16 %v61, %v60
    %v80 = vunpack.c.l.b16 %v35
    %v81 = vunpack.c.l.b16 %v36
    %v82 = vunpack.c.l.b16 %v37
    %v83 = vunpack.c.l.b16 %v38
    %v84 = vunpack.c.l.b16 %v39
    %v85 = vunpack.c.l.b16 %v40
    %v86 = vunpack.c.l.b16 %v41
    %v87 = vunpack.c.l.b16 %v42
    %v88 = vunpack.c.l.b16 %v43
    %v89 = vunpack.c.l.b16 %v44
    %v90 = vunpack.c.l.b16 %v45
    %v91 = vunpack.c.l.b16 %v46
    %v92 = vunpack.c.l.b16 %v47
    %v93 = vunpack.c.l.b16 %v48
    %v94 = vunpack.c.l.b16 %v49
    %v95 = vunpack.c.l.b16 %v50
    %v96 = vpack.c.b16 %v81, %v80
    %v97 = vpack.c.b16 %v83, %v82
    %v98 = vpack.c.b16 %v85, %v84
    %v99 = vpack.c.b16 %v87, %v86
    %v100 = vpack.c.b16 %v89, %v88
    %v101 = vpack.c.b16 %v91, %v90
    %v102 = vpack.c.b16 %v93, %v92
    %v103 = vpack.c.b16 %v95, %v94
    %112 = vmatprep.subr.bf16.mxu0 0
    %113 = vmatpush1.bf16.msra.mxu0 %v103
    %114 = vmatprep.subr.bf16.mxu0 0
    %115 = vmatpush1.bf16.msra.mxu0 %v102
    %116 = vmatprep.subr.bf16.mxu0 0
    %117 = vmatpush1.bf16.msra.mxu0 %v101
    %118 = vmatprep.subr.bf16.mxu0 0
    %119 = vmatpush1.bf16.msra.mxu0 %v100
    %120 = vmatprep.subr.bf16.mxu0 0
    %121 = vmatpush1.bf16.msra.mxu0 %v99
    %122 = vmatprep.subr.bf16.mxu0 0
    %123 = vmatpush1.bf16.msra.mxu0 %v98
    %124 = vmatprep.subr.bf16.mxu0 0
    %125 = vmatpush1.bf16.msra.mxu0 %v97
    %126 = vmatprep.subr.bf16.mxu0 0
    %127 = vmatpush1.bf16.msra.mxu0 %v96
    %128 = vmatprep.subr.bf16.mxu0 0
    %129 = vmatpush2.bf16.msra.mxu0 0
    %130 = vmatprep.subr.bf16.mxu0 0
    %131 = vmatpush2.bf16.msra.mxu0 0
    %132 = vmatprep.subr.bf16.mxu0 0
    %133 = vmatpush2.bf16.msra.mxu0 0
    %134 = vmatprep.subr.bf16.mxu0 0
    %135 = vmatpush2.bf16.msra.mxu0 0
    %136 = vmatprep.subr.bf16.mxu0 0
    %137 = vmatpush2.bf16.msra.mxu0 0
    %138 = vmatprep.subr.bf16.mxu0 0
    %139 = vmatpush2.bf16.msra.mxu0 0
    %140 = vmatprep.subr.bf16.mxu0 0
    %141 = vmatpush2.bf16.msra.mxu0 0
    %142 = vmatprep.subr.bf16.mxu0 0
    %143 = vmatpush2.bf16.msra.mxu0 0
    %144 = vmatprep.mubr.bf16.mxu0 0
    %145 = vmatmul.mubr.bf16.gmra.mxu0 %v62
    %v146 = vpop.f32.mrf.mxu0
    %v147 = vadd.f32 %v56, %v146
    %v148 = vpop.f32.mrf.mxu0
    %v149 = vpop.f32.mrf.mxu0
    %v150 = vadd.f32 %v56, %v149
    %v151 = vpop.f32.mrf.mxu0
    %152 = vdwg.mxu0
    %s153 = sld [smem:[#allocation2]]
    %v154 = vstv %s153
    %v155 = vmul.f32 %v147, %v154
    %v156 = vmul.f32 %v150, %v154
    %157 = vst [vmem:[%s4] sm:$0xff] %v155
    %158 = vst [vmem:[%s4 + $0x8] sm:$0xff] %v156
    // Predicated region
    $region22: #{_forward_impl.1} parent=1 // pred_check
      _
    $region23: #{_forward_impl.1} parent=1 // pred_check_branch
      %160 = sbr.rel (0) target = $region25
    $region24: #{_forward_impl.1} parent=1 // pred_region
      _
    $region25: #{_forward_impl.1} parent=1 // pred_fallthru
      _
    // Predicated region
    $region26: #{_forward_impl.1} parent=1 // pred_check
      _
    $region27: #{_forward_impl.1} parent=1 // pred_check_branch
      %162 = sbr.rel (0) target = $region29
    $region28: #{_forward_impl.1} parent=1 // pred_region
      _
    $region29: #{_forward_impl.1} parent=1 // pred_fallthru
      _
    %163 = vsyncpa [#allocation4], 1

</llo_original>
